<compile_context>
chip_gen: v7x
topology: tpu7x:2x2x1
jax: 0.10.0
libtpu: 0.0.40
codegen_flags: <defaults>
</compile_context>

<pallas_src>
import jax
import jax.numpy as jnp
from jax.experimental import pallas as pl
from jax.experimental.pallas import tpu as pltpu

# ----------------------------- configuration --------------------------------
N_INPUT = 3          # module default
N_OUTPUT = 6         # module default
N_LSTM_HIDDEN = 32   # H
N_CNN_HIDDEN = 16    # C
KERNEL_SIZE = 3
BATCH = 8            # full sublane occupancy (was 4)
SEQ = 2              # must satisfy SEQ // 2 == 1 (fc shape constraint)
BN_EPS = 1e-5

H = N_LSTM_HIDDEN
C = N_CNN_HIDDEN
G = 4 * H            # 128 gate lanes

# ---- weight-slab row offsets (all multiples of 8 => f32 tile aligned) -------
ROW_XG = 0                          # (SEQ*NI, 2G) block-diag x-gate weight
ROW_HH = 8                          # (H, G)       recurrent weight
ROW_CONV = ROW_HH + H               # 40: (2H, 2C) proj-folded conv block
ROW_FC = ROW_CONV + 2 * H           # 104: (C, NO) fc weight
W_SLAB_ROWS = ROW_FC + C            # 120
W_SLAB_COLS = 2 * G                 # 256

# ---- bias-slab rows ----------------------------------------------------------
BROW_LSTM = 0     # [b_ih+b_hh | b_ih+b_hh]   (2G,)
BROW_CONV = 1     # [conv bias row0 | row1]   (2C,)
BROW_GAMMA = 2    # BN gamma                  (C,)
BROW_BETA = 3     # BN beta                   (C,)
BROW_FC = 4       # fc bias                   (NO,)
B_SLAB_ROWS = 8


# ------------------------------- kernel --------------------------------------
def cnn_lstm_kernel(x_ref,        # (B, SEQ*NI)            f32
                    w_ref,        # (W_SLAB_ROWS, 2G)      f32 weight slab
                    b_ref,        # (B_SLAB_ROWS, 2G)      f32 bias/BN slab
                    out_ref):     # (B, NO)                f32
    f32 = jnp.float32

    # ---- static slab views (zero-cost ref slices, tile-aligned rows) --------
    w_xg = w_ref[ROW_XG:ROW_XG + SEQ * N_INPUT, :]               # (6, 256)
    w_hh = w_ref[ROW_HH:ROW_HH + H, 0:G]                         # (32, 128)
    w_conv = w_ref[ROW_CONV:ROW_CONV + 2 * H, 0:2 * C]           # (64, 32)
    w_fc = w_ref[ROW_FC:ROW_FC + C, 0:N_OUTPUT]                  # (16, 6)

    b_lstm2 = b_ref[BROW_LSTM:BROW_LSTM + 1, :]                  # (1, 256)
    b_conv2 = b_ref[BROW_CONV:BROW_CONV + 1, 0:2 * C]            # (1, 32)
    gamma = b_ref[BROW_GAMMA:BROW_GAMMA + 1, 0:C]                # (1, 16)
    beta = b_ref[BROW_BETA:BROW_BETA + 1, 0:C]                   # (1, 16)
    b_fc = b_ref[BROW_FC:BROW_FC + 1, 0:N_OUTPUT]                # (1, 6)

    # ---- x-gate contributions for BOTH timesteps: one off-chain MXU dot -----
    xg = jnp.dot(x_ref[...], w_xg, preferred_element_type=f32) + b_lstm2  # (B, 256)
    xg0 = xg[:, 0:G]                 # vreg-aligned 128-lane slices
    xg1 = xg[:, G:2 * G]

    # ---- t = 0: h0 = c0 = 0 -> no recurrent matmul, no f*c term -------------
    sig0 = jax.nn.sigmoid(xg0)       # lane-full (B, 4H) EUP ops
    th0 = jnp.tanh(xg0)
    c = sig0[:, 0:H] * th0[:, 2 * H:3 * H]                  # i ⊙ g
    seq0 = sig0[:, 3 * H:4 * H] * jnp.tanh(c)               # o ⊙ tanh(c)

    # ---- t = 1: the ONLY MXU dot on the serial LSTM dependence chain --------
    gates1 = xg1 + jnp.dot(seq0, w_hh, preferred_element_type=f32)
    sig1 = jax.nn.sigmoid(gates1)
    th1 = jnp.tanh(gates1)
    c = sig1[:, H:2 * H] * c + sig1[:, 0:H] * th1[:, 2 * H:3 * H]   # f⊙c + i⊙g
    seq1 = sig1[:, 3 * H:4 * H] * jnp.tanh(c)                        # o ⊙ tanh(c)

    # ---- (projection ∘ Conv1d) folded into ONE dot; MaxPool = lane-half max -
    #   output lanes [0:C)   = conv row 0 = proj0@Wc1 + proj1@Wc2 + b
    #   output lanes [C:2C)  = conv row 1 = proj0@Wc0 + proj1@Wc1 + b
    seq_cat = jnp.concatenate([seq0, seq1], axis=1)                       # (B, 2H)
    conv_pair = jnp.dot(seq_cat, w_conv, preferred_element_type=f32) + b_conv2
    pooled = jnp.maximum(conv_pair[:, 0:C], conv_pair[:, C:2 * C])        # (B, C)

    # ---- BatchNorm1d (training-mode batch stats, biased variance) -----------
    mean = jnp.mean(pooled, axis=0, keepdims=True)                        # (1, C)
    var = jnp.mean((pooled - mean) ** 2, axis=0, keepdims=True)
    bn = (pooled - mean) * (gamma * jax.lax.rsqrt(var + BN_EPS)) + beta   # (B, C)

    # ---- flatten (L' = 1 -> identity) + fc Linear(C -> NO) ------------------
    out_ref[...] = jnp.dot(bn, w_fc, preferred_element_type=f32) + b_fc


# ------------------------------- wrapper --------------------------------------
@jax.jit
def cnn_lstm_forward(x, params):
    B, T, NI = x.shape
    assert T == SEQ == 2 and NI == N_INPUT, "fc shape only valid when pooled length == 1"
    # Contiguous reshape (free bitcast, unlike the old transpose): each row is
    # [t0 features | t1 features], matching the block-diagonal x-gate weight.
    x2d = x.reshape(B, SEQ * N_INPUT)
    return pl.pallas_call(
        cnn_lstm_kernel,
        out_shape=jax.ShapeDtypeStruct((B, N_OUTPUT), jnp.float32),
        in_specs=[pl.BlockSpec(memory_space=pltpu.MemorySpace.VMEM)] * 3,
        out_specs=pl.BlockSpec(memory_space=pltpu.MemorySpace.VMEM),
    )(x2d, params["w_slab"], params["b_slab"])


def init_params(key):
    """Deterministic synthetic parameters in PyTorch shapes, pre-folded and
    packed into two float32 VMEM slabs (one weight slab, one bias/BN slab)."""
    K, NI, NO = KERNEL_SIZE, N_INPUT, N_OUTPUT
    ks = jax.random.split(key, 10)
    u = lambda k, shape, s=0.1: jax.random.uniform(k, shape, jnp.float32, -s, s)
    # torch shapes: w_ih (4H,NI), w_hh (4H,H), proj.W (C,H), conv.W (Cout,Cin,K), fc.W (NO,C)
    w_ih = u(ks[0], (G, NI))
    w_hh = u(ks[1], (G, H))
    b_ih = u(ks[2], (G,))
    b_hh = u(ks[3], (G,))
    w_proj = u(ks[4], (C, H))
    b_proj = u(ks[5], (C,))
    w_conv = u(ks[6], (C, C, K))
    b_conv = u(ks[7], (C,))
    w_fc = u(ks[8], (NO, C))
    b_fc = u(ks[9], (NO,))
    gamma = jnp.ones((C,), jnp.float32)      # BatchNorm1d default init
    beta = jnp.zeros((C,), jnp.float32)

    w_ih_t = w_ih.T                                   # (NI, 4H)
    w_hh_t = w_hh.T                                   # (H, 4H)
    wp_t = w_proj.T                                   # (H, C)
    wc = jnp.transpose(w_conv, (2, 1, 0))             # (K, Cin, Cout)

    # -- x-gate block-diagonal weight: one dot covers both timesteps ----------
    z = jnp.zeros((NI, G), jnp.float32)
    w_xg_block = jnp.block([[w_ih_t, z], [z, w_ih_t]])        # (2*NI, 2*4H)
    b_lstm = b_ih + b_hh                                      # folded LSTM bias
    b_lstm2 = jnp.concatenate([b_lstm, b_lstm])               # (2*4H,)

    # -- projection folded into conv (exact: no nonlinearity in between) ------
    fold = [wp_t @ wc[k] for k in range(K)]                   # each (H, C)
    # conv row 0 = proj0@Wc1 + proj1@Wc2 ; conv row 1 = proj0@Wc0 + proj1@Wc1
    w_conv_block = jnp.block([[fold[1], fold[0]],
                              [fold[2], fold[1]]])            # (2H, 2C)
    b_conv_pair = jnp.concatenate([b_proj @ (wc[1] + wc[2]) + b_conv,
                                   b_proj @ (wc[0] + wc[1]) + b_conv])   # (2C,)

    # -- pack the two slabs (row offsets are f32-tile aligned) ----------------
    w_slab = jnp.zeros((W_SLAB_ROWS, W_SLAB_COLS), jnp.float32)
    w_slab = w_slab.at[ROW_XG:ROW_XG + 2 * NI, :].set(w_xg_block)
    w_slab = w_slab.at[ROW_HH:ROW_HH + H, 0:G].set(w_hh_t)
    w_slab = w_slab.at[ROW_CONV:ROW_CONV + 2 * H, 0:2 * C].set(w_conv_block)
    w_slab = w_slab.at[ROW_FC:ROW_FC + C, 0:NO].set(w_fc.T)

    b_slab = jnp.zeros((B_SLAB_ROWS, W_SLAB_COLS), jnp.float32)
    b_slab = b_slab.at[BROW_LSTM, :].set(b_lstm2)
    b_slab = b_slab.at[BROW_CONV, 0:2 * C].set(b_conv_pair)
    b_slab = b_slab.at[BROW_GAMMA, 0:C].set(gamma)
    b_slab = b_slab.at[BROW_BETA, 0:C].set(beta)
    b_slab = b_slab.at[BROW_FC, 0:NO].set(b_fc)
    return {"w_slab": w_slab, "b_slab": b_slab}


if __name__ == "__main__":
    key = jax.random.PRNGKey(0)
    kx, kp = jax.random.split(key)
    x = jax.random.normal(kx, (BATCH, SEQ, N_INPUT), jnp.float32)
    params = init_params(kp)

    out = cnn_lstm_forward(x, params)
    out = jax.block_until_ready(out)
    assert out.shape == (BATCH, N_OUTPUT) and out.dtype == jnp.float32
    assert bool(jnp.all(jnp.isfinite(out)))
    print("KERNEL_OK")
</pallas_src>

<mosaic_0001>
module attributes {stable_mosaic.version = 11 : i64} {
  func.func @cnn_lstm_kernel(%arg0: memref<8x6xf32, #tpu.memory_space<vmem>>, %arg1: memref<120x256xf32, #tpu.memory_space<vmem>>, %arg2: memref<8x256xf32, #tpu.memory_space<vmem>>, %arg3: memref<8x6xf32, #tpu.memory_space<vmem>>) attributes {dimension_semantics = [], scalar_prefetch = 0 : i64, scratch_operands = 0 : i64, tpu.core_type = #tpu.core_type<tc>} {
    %c0 = arith.constant 0 : index
    %c0_0 = arith.constant 0 : index
    %0 = vector.load %arg1[%c0, %c0_0] : memref<120x256xf32, #tpu.memory_space<vmem>>, vector<6x256xf32>
    %c8 = arith.constant 8 : index
    %c0_1 = arith.constant 0 : index
    %1 = vector.load %arg1[%c8, %c0_1] : memref<120x256xf32, #tpu.memory_space<vmem>>, vector<32x128xf32>
    %c40 = arith.constant 40 : index
    %c0_2 = arith.constant 0 : index
    %2 = vector.load %arg1[%c40, %c0_2] : memref<120x256xf32, #tpu.memory_space<vmem>>, vector<64x32xf32>
    %c104 = arith.constant 104 : index
    %c0_3 = arith.constant 0 : index
    %3 = vector.load %arg1[%c104, %c0_3] : memref<120x256xf32, #tpu.memory_space<vmem>>, vector<16x6xf32>
    %c0_4 = arith.constant 0 : index
    %c0_5 = arith.constant 0 : index
    %4 = vector.load %arg2[%c0_4, %c0_5] : memref<8x256xf32, #tpu.memory_space<vmem>>, vector<1x256xf32>
    %c1 = arith.constant 1 : index
    %c0_6 = arith.constant 0 : index
    %5 = vector.load %arg2[%c1, %c0_6] : memref<8x256xf32, #tpu.memory_space<vmem>>, vector<1x32xf32>
    %c2 = arith.constant 2 : index
    %c0_7 = arith.constant 0 : index
    %6 = vector.load %arg2[%c2, %c0_7] : memref<8x256xf32, #tpu.memory_space<vmem>>, vector<1x16xf32>
    %c3 = arith.constant 3 : index
    %c0_8 = arith.constant 0 : index
    %7 = vector.load %arg2[%c3, %c0_8] : memref<8x256xf32, #tpu.memory_space<vmem>>, vector<1x16xf32>
    %c4 = arith.constant 4 : index
    %c0_9 = arith.constant 0 : index
    %8 = vector.load %arg2[%c4, %c0_9] : memref<8x256xf32, #tpu.memory_space<vmem>>, vector<1x6xf32>
    %c0_10 = arith.constant 0 : index
    %c0_11 = arith.constant 0 : index
    %9 = vector.load %arg0[%c0_10, %c0_11] : memref<8x6xf32, #tpu.memory_space<vmem>>, vector<8x6xf32>
    %cst = arith.constant dense<0.000000e+00> : vector<8x256xf32>
    %10 = tpu.matmul %9, %0, %cst {dimension_numbers = #tpu.dot_dimension_numbers<[1], [0], [0], [1], [0, 0, 1, 1], [], []>} : vector<8x6xf32>, vector<6x256xf32>, vector<8x256xf32> -> vector<8x256xf32>
    %11 = vector.broadcast %4 : vector<1x256xf32> to vector<8x256xf32>
    %12 = arith.addf %10, %11 : vector<8x256xf32>
    %13 = vector.extract_strided_slice %12 {offsets = [0, 0], sizes = [8, 128], strides = [1, 1]} : vector<8x256xf32> to vector<8x128xf32>
    %14 = vector.extract_strided_slice %12 {offsets = [0, 128], sizes = [8, 128], strides = [1, 1]} : vector<8x256xf32> to vector<8x128xf32>
    %15 = arith.negf %13 : vector<8x128xf32>
    %16 = math.exp %15 : vector<8x128xf32>
    %cst_12 = arith.constant 1.000000e+00 : f32
    %17 = vector.broadcast %cst_12 : f32 to vector<8x128xf32>
    %18 = arith.addf %17, %16 : vector<8x128xf32>
    %19 = arith.divf %17, %18 : vector<8x128xf32>
    %20 = math.tanh %13 : vector<8x128xf32>
    %21 = vector.extract_strided_slice %19 {offsets = [0, 0], sizes = [8, 32], strides = [1, 1]} : vector<8x128xf32> to vector<8x32xf32>
    %22 = vector.extract_strided_slice %20 {offsets = [0, 64], sizes = [8, 32], strides = [1, 1]} : vector<8x128xf32> to vector<8x32xf32>
    %23 = arith.mulf %21, %22 : vector<8x32xf32>
    %24 = vector.extract_strided_slice %19 {offsets = [0, 96], sizes = [8, 32], strides = [1, 1]} : vector<8x128xf32> to vector<8x32xf32>
    %25 = math.tanh %23 : vector<8x32xf32>
    %26 = arith.mulf %24, %25 : vector<8x32xf32>
    %cst_13 = arith.constant dense<0.000000e+00> : vector<8x128xf32>
    %27 = tpu.matmul %26, %1, %cst_13 {dimension_numbers = #tpu.dot_dimension_numbers<[1], [0], [0], [1], [0, 0, 1, 1], [], []>} : vector<8x32xf32>, vector<32x128xf32>, vector<8x128xf32> -> vector<8x128xf32>
    %28 = arith.addf %14, %27 : vector<8x128xf32>
    %29 = arith.negf %28 : vector<8x128xf32>
    %30 = math.exp %29 : vector<8x128xf32>
    %cst_14 = arith.constant 1.000000e+00 : f32
    %31 = vector.broadcast %cst_14 : f32 to vector<8x128xf32>
    %32 = arith.addf %31, %30 : vector<8x128xf32>
    %33 = arith.divf %31, %32 : vector<8x128xf32>
    %34 = math.tanh %28 : vector<8x128xf32>
    %35 = vector.extract_strided_slice %33 {offsets = [0, 32], sizes = [8, 32], strides = [1, 1]} : vector<8x128xf32> to vector<8x32xf32>
    %36 = arith.mulf %35, %23 : vector<8x32xf32>
    %37 = vector.extract_strided_slice %33 {offsets = [0, 0], sizes = [8, 32], strides = [1, 1]} : vector<8x128xf32> to vector<8x32xf32>
    %38 = vector.extract_strided_slice %34 {offsets = [0, 64], sizes = [8, 32], strides = [1, 1]} : vector<8x128xf32> to vector<8x32xf32>
    %39 = arith.mulf %37, %38 : vector<8x32xf32>
    %40 = arith.addf %36, %39 : vector<8x32xf32>
    %41 = vector.extract_strided_slice %33 {offsets = [0, 96], sizes = [8, 32], strides = [1, 1]} : vector<8x128xf32> to vector<8x32xf32>
    %42 = math.tanh %40 : vector<8x32xf32>
    %43 = arith.mulf %41, %42 : vector<8x32xf32>
    %44 = tpu.concatenate %26, %43 in 1 : vector<8x32xf32>, vector<8x32xf32> -> vector<8x64xf32>
    %cst_15 = arith.constant dense<0.000000e+00> : vector<8x32xf32>
    %45 = tpu.matmul %44, %2, %cst_15 {dimension_numbers = #tpu.dot_dimension_numbers<[1], [0], [0], [1], [0, 0, 1, 1], [], []>} : vector<8x64xf32>, vector<64x32xf32>, vector<8x32xf32> -> vector<8x32xf32>
    %46 = vector.broadcast %5 : vector<1x32xf32> to vector<8x32xf32>
    %47 = arith.addf %45, %46 : vector<8x32xf32>
    %48 = vector.extract_strided_slice %47 {offsets = [0, 0], sizes = [8, 16], strides = [1, 1]} : vector<8x32xf32> to vector<8x16xf32>
    %49 = vector.extract_strided_slice %47 {offsets = [0, 16], sizes = [8, 16], strides = [1, 1]} : vector<8x32xf32> to vector<8x16xf32>
    %50 = arith.maximumf %48, %49 : vector<8x16xf32>
    %cst_16 = arith.constant dense<0.000000e+00> : vector<16xf32>
    %51 = vector.multi_reduction <add>, %50, %cst_16 [0] : vector<8x16xf32> to vector<16xf32>
    %52 = vector.shape_cast %51 : vector<16xf32> to vector<1x16xf32>
    %cst_17 = arith.constant 8.000000e+00 : f32
    %53 = vector.broadcast %cst_17 : f32 to vector<1x16xf32>
    %54 = arith.divf %52, %53 : vector<1x16xf32>
    %55 = vector.broadcast %54 : vector<1x16xf32> to vector<8x16xf32>
    %56 = arith.subf %50, %55 : vector<8x16xf32>
    %57 = arith.mulf %56, %56 : vector<8x16xf32>
    %cst_18 = arith.constant dense<0.000000e+00> : vector<16xf32>
    %58 = vector.multi_reduction <add>, %57, %cst_18 [0] : vector<8x16xf32> to vector<16xf32>
    %59 = vector.shape_cast %58 : vector<16xf32> to vector<1x16xf32>
    %cst_19 = arith.constant 8.000000e+00 : f32
    %60 = vector.broadcast %cst_19 : f32 to vector<1x16xf32>
    %61 = arith.divf %59, %60 : vector<1x16xf32>
    %62 = vector.broadcast %54 : vector<1x16xf32> to vector<8x16xf32>
    %63 = arith.subf %50, %62 : vector<8x16xf32>
    %cst_20 = arith.constant 9.99999974E-6 : f32
    %64 = vector.broadcast %cst_20 : f32 to vector<1x16xf32>
    %65 = arith.addf %61, %64 : vector<1x16xf32>
    %66 = math.rsqrt %65 : vector<1x16xf32>
    %67 = arith.mulf %6, %66 : vector<1x16xf32>
    %68 = vector.broadcast %67 : vector<1x16xf32> to vector<8x16xf32>
    %69 = arith.mulf %63, %68 : vector<8x16xf32>
    %70 = vector.broadcast %7 : vector<1x16xf32> to vector<8x16xf32>
    %71 = arith.addf %69, %70 : vector<8x16xf32>
    %cst_21 = arith.constant dense<0.000000e+00> : vector<8x6xf32>
    %72 = tpu.matmul %71, %3, %cst_21 {dimension_numbers = #tpu.dot_dimension_numbers<[1], [0], [0], [1], [0, 0, 1, 1], [], []>} : vector<8x16xf32>, vector<16x6xf32>, vector<8x6xf32> -> vector<8x6xf32>
    %73 = vector.broadcast %8 : vector<1x6xf32> to vector<8x6xf32>
    %74 = arith.addf %72, %73 : vector<8x6xf32>
    %c0_22 = arith.constant 0 : index
    %c0_23 = arith.constant 0 : index
    %75 = vector.load %arg3[%c0_22, %c0_23] : memref<8x6xf32, #tpu.memory_space<vmem>>, vector<8x6xf32>
    tpu.vector_store %arg3[%c0_22, %c0_23], %74 {strides = array<i32>} : memref<8x6xf32, #tpu.memory_space<vmem>>, vector<8x6xf32>,
    return
  }
}

</mosaic_0001>

<llo_original>
// kernel: cnn_lstm_forward.1
$region0: #{cnn_lstm_forward.1}
  #allocation0 [shape = 'u32[]', space=smem, size = 0x4, offset = 0x4, fixed_abs, tag = 'smem constant byte address 0x4 - core index']
  #allocation1 [shape = 'u32[144,128]{1,0:T(1,128)}', space=vmem, size = 0x12000, scoped, tag = 'internal scratch']
  %s0 = inlined_call_operand.vmem [shape: f32[8,6], index: 0, kind: input, shape index: {}]
  %s1 = inlined_call_operand.hbm [shape: f32[120,256], index: 1, kind: input, shape index: {}]
  %s2 = inlined_call_operand.vmem [shape: f32[8,256], index: 2, kind: input, shape index: {}]
  %s3 = inlined_call_operand.hbm [shape: f32[8,6], index: 3, kind: output, shape index: {}]
  %s4 = sld [smem:[#allocation0]]
  $region26: #{cnn_lstm_forward.1} parent=0
    _
  %s6 = ssub.s32 1, %s4
  %s7 = scalar_select 0, %s6, %s4
  $region1: #{cnn_lstm_forward.1} parent=0
    #allocation2 [shape = 'u8[122880]{0}', space=vmem, size = 0x1e000, scoped, tag = 'input window, operand 1, single buffered']
    #allocation3 [shape = 's32[1]{0}', space=sflag, size = 0x4, scoped, tag = 'scoped memory for cnn_lstm_forward.1']
    #allocation4 [shape = 's32[1]{0}', space=sflag, size = 0x4, scoped, tag = 'scoped memory for cnn_lstm_forward.1']
    #allocation5 [shape = 'u8[4096]{0}', space=vmem, size = 0x1000, scoped, tag = 'output window, operand 0, single buffered']
    %8 = vsyncpa [#allocation3], 0
    %9 = vsyncpa [#allocation4], 0
    // Predicated region
    $region2: #{cnn_lstm_forward.1} parent=1 // pred_check
      _
    $region3: #{cnn_lstm_forward.1} parent=1 // pred_check_branch
      %11 = sbr.rel (0) target = $region5
    $region4: #{cnn_lstm_forward.1} parent=1 // pred_region
      _
    $region5: #{cnn_lstm_forward.1} parent=1 // pred_fallthru
      _
    // Predicated region
    $region6: #{cnn_lstm_forward.1} parent=1 // pred_check
      _
    $region7: #{cnn_lstm_forward.1} parent=1 // pred_check_branch
      %13 = sbr.rel (0) target = $region9
    $region8: #{cnn_lstm_forward.1} parent=1 // pred_region
      %s15 = ssub.s32 3840, 3840
      %16 = vsyncadd [#allocation3], %s15
      %s17 = sshll.u32 [#allocation2], 4
      %s18 = int_to_ptr.vmem [resolvable:$true] %s17
      %23 = dma.hbm_to_vmem [thread:$0]  %s1, 3840, %s18, [#allocation3], 256, 256, 16
    $region9: #{cnn_lstm_forward.1} parent=1 // pred_fallthru
      _
    // Predicated region
    $region10: #{cnn_lstm_forward.1} parent=1 // pred_check
      _
    $region11: #{cnn_lstm_forward.1} parent=1 // pred_check_branch
      %25 = sbr.rel (0) target = $region13
    $region12: #{cnn_lstm_forward.1} parent=1 // pred_region
      _
    $region13: #{cnn_lstm_forward.1} parent=1 // pred_fallthru
      _
    // Predicated region
    $region14: #{cnn_lstm_forward.1} parent=1 // pred_check
      _
    $region15: #{cnn_lstm_forward.1} parent=1 // pred_check_branch
      %27 = sbr.rel (0) target = $region17
    $region16: #{cnn_lstm_forward.1} parent=1 // pred_region
      %28 = dma.done [#allocation3], 3840
    $region17: #{cnn_lstm_forward.1} parent=1 // pred_fallthru
      _
    %v29 = vld [vmem:[#allocation2] sm:$0x3f]
    %v30 = vld [vmem:[#allocation2 + $0x8] sm:$0x3f]
    %v31 = vld [vmem:[#allocation2 + $0x10] sm:$0xff]
    %v32 = vld [vmem:[#allocation2 + $0x20] sm:$0xff]
    %v33 = vld [vmem:[#allocation2 + $0x30] sm:$0xff]
    %v34 = vld [vmem:[#allocation2 + $0x40] sm:$0xff]
    %v35 = vld [vmem:[#allocation2 + $0x50] sm:$0xff]
    %v36 = vld [vmem:[#allocation2 + $0x60] sm:$0xff]
    %v37 = vld [vmem:[#allocation2 + $0x70] sm:$0xff]
    %v38 = vld [vmem:[#allocation2 + $0x80] sm:$0xff]
    %v39 = vld [vmem:[#allocation2 + $0x90] sm:$0xff]
    %v40 = vld [vmem:[#allocation2 + $0xa0] sm:$0xff]
    %v41 = vld [vmem:[#allocation2 + $0xb0] sm:$0xff]
    %v42 = vld [vmem:[#allocation2 + $0xc0] sm:$0xff]
    %v43 = vld [vmem:[#allocation2 + $0xd0] sm:$0xff]
    %v44 = vld [vmem:[#allocation2 + $0xe0] sm:$0xff]
    %v45 = vld [vmem:[%s2] ss:$8 sm:$0x3]
    %v46 = vld [vmem:[%s2 + $0x1] ss:$0 sm:$0xff]
    %v47 = vld [vmem:[%s2 + $0x2] ss:$0 sm:$0xff]
    %v48 = vld [vmem:[%s2 + $0x3] ss:$0 sm:$0xff]
    %v49 = vld [vmem:[%s2 + $0x4] ss:$0 sm:$0xff]
    %v50 = vld [vmem:[%s0] sm:$0xff]
    %v52 = vlaneseq
    %v53 = vshrl.u32 %v52, 7
    %v54 = vsub.s32 0, %v53
    %v55 = vrot.slane %v45, %v54
    %v56 = vlaneseq
    %v57 = vshrl.u32 %v56, 7
    %v58 = vsub.s32 1, %v57
    %v59 = vrot.slane %v45, %v58
    %vm62 = vcmask 48128
    %v64 = vsel %vm62, %v50, 0
    %vm66 = vcmask 1045504
    %v68 = vsel %vm66, %v29, 0
    %v71 = vsel %vm66, %v30, 0
    %73 = vmatprep.subr.mxu0 %v71
    %74 = vmatpush1.msra.mxu0 %v68
    %75 = vmatprep.subr.mxu0 0.0
    %76 = vmatpush1.msra.mxu0 0.0
    %77 = vmatprep.subr.mxu0 0.0
    %78 = vmatpush1.msra.mxu0 0.0
    %79 = vmatprep.subr.mxu0 0.0
    %80 = vmatpush1.msra.mxu0 0.0
    %81 = vmatprep.subr.mxu0 0.0
    %82 = vmatpush1.msra.mxu0 0.0
    %83 = vmatprep.subr.mxu0 0.0
    %84 = vmatpush1.msra.mxu0 0.0
    %85 = vmatprep.subr.mxu0 0.0
    %86 = vmatpush1.msra.mxu0 0.0
    %87 = vmatprep.subr.mxu0 0.0
    %88 = vmatpush1.msra.mxu0 0.0
    %89 = vmatprep.subr.mxu0 0.0
    %90 = vmatpush1.msra.mxu0 0.0
    %91 = vmatprep.subr.mxu0 0.0
    %92 = vmatpush1.msra.mxu0 0.0
    %93 = vmatprep.subr.mxu0 0.0
    %94 = vmatpush1.msra.mxu0 0.0
    %95 = vmatprep.subr.mxu0 0.0
    %96 = vmatpush1.msra.mxu0 0.0
    %97 = vmatprep.subr.mxu0 0.0
    %98 = vmatpush1.msra.mxu0 0.0
    %99 = vmatprep.subr.mxu0 0.0
    %100 = vmatpush1.msra.mxu0 0.0
    %101 = vmatprep.subr.mxu0 0.0
    %102 = vmatpush1.msra.mxu0 0.0
    %103 = vmatprep.subr.mxu0 0.0
    %104 = vmatpush1.msra.mxu0 0.0
    %105 = vmatprep.subr.mxu0 0.0
    %106 = vmatpush1.msra.mxu0 0.0
    %107 = vmatprep.subr.mxu0 0.0
    %108 = vmatpush1.msra.mxu0 0.0
    %109 = vmatprep.subr.mxu0 0.0
    %110 = vmatpush1.msra.mxu0 0.0
    %111 = vmatprep.subr.mxu0 0.0
    %112 = vmatpush1.msra.mxu0 0.0
    %113 = vmatprep.subr.mxu0 0.0
    %114 = vmatpush1.msra.mxu0 0.0
    %115 = vmatprep.subr.mxu0 0.0
    %116 = vmatpush1.msra.mxu0 0.0
    %117 = vmatprep.subr.mxu0 0.0
    %118 = vmatpush1.msra.mxu0 0.0
    %119 = vmatprep.subr.mxu0 0.0
    %120 = vmatpush1.msra.mxu0 0.0
    %121 = vmatprep.subr.mxu0 0.0
    %122 = vmatpush1.msra.mxu0 0.0
    %123 = vmatprep.subr.mxu0 0.0
    %124 = vmatpush1.msra.mxu0 0.0
    %125 = vmatprep.subr.mxu0 0.0
    %126 = vmatpush1.msra.mxu0 0.0
    %127 = vmatprep.subr.mxu0 0.0
    %128 = vmatpush1.msra.mxu0 0.0
    %129 = vmatprep.subr.mxu0 0.0
    %130 = vmatpush1.msra.mxu0 0.0
    %131 = vmatprep.subr.mxu0 0.0
    %132 = vmatpush1.msra.mxu0 0.0
    %133 = vmatprep.subr.mxu0 0.0
    %134 = vmatpush1.msra.mxu0 0.0
    %135 = vmatprep.subr.mxu0 0.0
    %136 = vmatpush1.msra.mxu0 0.0
    %137 = vmatprep.mubr.f32.mxu0 0.0
    %138 = vmatmul.mubr.f32.gmra.mrb[0].mxu0 %v64
    %v139 = vpop.f32.mrb[0].mxu0
    %v140 = vadd.f32 %v55, %v139
    %v141 = vpop.f32.mrb[0].mxu0
    %v142 = vadd.f32 %v59, %v141
    %143 = vdwg.mxu0
    %v144 = vxor.u32 %v140, 2147483648
    %v145 = vmul.f32 %v144, 1.442695
    %v146 = vpow.pop %v145
    %v147 = vadd.f32 %v146, 1.0
    %v148 = vrcp.pop %v147
    %v149 = vmul.f32 1.0, %v148
    %v150 = vtanh.pop %v140
    %152 = vrot.lane.b32.xlu0 %v150, 64
    %v153 = vpop.permute.xlu0 %152
    %v155 = vmul.f32 %v149, %v153
    %v156 = vtanh.pop %v155
    %158 = vrot.lane.b32.xlu0 %v156, 96
    %v159 = vpop.permute.xlu0 %158
    %v161 = vmul.f32 %v149, %v159
    %163 = vrot.lane.b32.xlu0 %v161, 32
    %v164 = vpop.permute.xlu0 %163
    %vm165 = vcmask 261120
    %v166 = vsel %vm165, %v164, 0
    %168 = vmatprep.subr.mxu0 0.0
    %169 = vmatpush1.msra.mxu0 %v31
    %170 = vmatprep.subr.mxu0 0.0
    %171 = vmatpush1.msra.mxu0 %v32
    %172 = vmatprep.subr.mxu0 0.0
    %173 = vmatpush1.msra.mxu0 %v33
    %174 = vmatprep.subr.mxu0 0.0
    %175 = vmatpush1.msra.mxu0 %v34
    %176 = vmatprep.subr.mxu0 0.0
    %177 = vmatpush1.msra.mxu0 0.0
    %178 = vmatprep.subr.mxu0 0.0
    %179 = vmatpush1.msra.mxu0 0.0
    %180 = vmatprep.subr.mxu0 0.0
    %181 = vmatpush1.msra.mxu0 0.0
    %182 = vmatprep.subr.mxu0 0.0
    %183 = vmatpush1.msra.mxu0 0.0
    %184 = vmatprep.subr.mxu0 0.0
    %185 = vmatpush1.msra.mxu0 0.0
    %186 = vmatprep.subr.mxu0 0.0
    %187 = vmatpush1.msra.mxu0 0.0
    %188 = vmatprep.subr.mxu0 0.0
    %189 = vmatpush1.msra.mxu0 0.0
    %190 = vmatprep.subr.mxu0 0.0
    %191 = vmatpush1.msra.mxu0 0.0
    %192 = vmatprep.subr.mxu0 0.0
    %193 = vmatpush1.msra.mxu0 0.0
    %194 = vmatprep.subr.mxu0 0.0
    %195 = vmatpush1.msra.mxu0 0.0
    %196 = vmatprep.subr.mxu0 0.0
    %197 = vmatpush1.msra.mxu0 0.0
    %198 = vmatprep.subr.mxu0 0.0
    %199 = vmatpush1.msra.mxu0 0.0
    %200 = vmatprep.subr.mxu0 0.0
    %201 = vmatpush1.msra.mxu0 0.0
    %202 = vmatprep.subr.mxu0 0.0
    %203 = vmatpush1.msra.mxu0 0.0
    %204 = vmatprep.subr.mxu0 0.0
    %205 = vmatpush1.msra.mxu0 0.0
    %206 = vmatprep.subr.mxu0 0.0
    %207 = vmatpush1.msra.mxu0 0.0
    %208 = vmatprep.subr.mxu0 0.0
    %209 = vmatpush1.msra.mxu0 0.0
    %210 = vmatprep.subr.mxu0 0.0
    %211 = vmatpush1.msra.mxu0 0.0
    %212 = vmatprep.subr.mxu0 0.0
    %213 = vmatpush1.msra.mxu0 0.0
    %214 = vmatprep.subr.mxu0 0.0
    %215 = vmatpush1.msra.mxu0 0.0
    %216 = vmatprep.subr.mxu0 0.0
    %217 = vmatpush1.msra.mxu0 0.0
    %218 = vmatprep.subr.mxu0 0.0
    %219 = vmatpush1.msra.mxu0 0.0
    %220 = vmatprep.subr.mxu0 0.0
    %221 = vmatpush1.msra.mxu0 0.0
    %222 = vmatprep.subr.mxu0 0.0
    %223 = vmatpush1.msra.mxu0 0.0
    %224 = vmatprep.subr.mxu0 0.0
    %225 = vmatpush1.msra.mxu0 0.0
    %226 = vmatprep.subr.mxu0 0.0
    %227 = vmatpush1.msra.mxu0 0.0
    %228 = vmatprep.subr.mxu0 0.0
    %229 = vmatpush1.msra.mxu0 0.0
    %230 = vmatprep.subr.mxu0 0.0
    %231 = vmatpush1.msra.mxu0 0.0
    %232 = vmatprep.mubr.f32.mxu0 0.0
    %233 = vmatmul.mubr.f32.gmra.mrb[0].mxu0 %v166
    %v234 = vpop.f32.mrb[0].mxu0
    %v235 = vadd.f32 0.0, %v234
    %v236 = vpop.f32.mrb[0].mxu0
    %237 = vdwg.mxu0
    %v238 = vadd.f32 %v142, %v235
    %v239 = vxor.u32 %v238, 2147483648
    %v240 = vmul.f32 %v239, 1.442695
    %v241 = vpow.pop %v240
    %v242 = vadd.f32 %v241, 1.0
    %v243 = vrcp.pop %v242
    %v244 = vmul.f32 1.0, %v243
    %v245 = vtanh.pop %v238
    %247 = vrot.lane.b32.xlu0 %v155, 32
    %v248 = vpop.permute.xlu0 %247
    %v250 = vmul.f32 %v244, %v248
    %252 = vrot.lane.b32.xlu0 %v245, 64
    %v253 = vpop.permute.xlu0 %252
    %v255 = vmul.f32 %v244, %v253
    %257 = vrot.lane.b32.xlu0 %v255, 32
    %v258 = vpop.permute.xlu0 %257
    %v260 = vadd.f32 %v250, %v258
    %v261 = vtanh.pop %v260
    %263 = vrot.lane.b32.xlu0 %v261, 64
    %v264 = vpop.permute.xlu0 %263
    %v266 = vmul.f32 %v244, %v264
    %269 = vrot.lane.b32.xlu0 %v266, 64
    %v270 = vpop.permute.xlu0 %269
    %v272 = vsel %vm165, %v164, %v270
    %vm273 = vcmask 523264
    %v275 = vsel %vm273, %v272, 0
    %277 = vmatprep.subr.mxu0 0.0
    %278 = vmatpush1.msra.mxu0 %v35
    %279 = vmatprep.subr.mxu0 0.0
    %280 = vmatpush1.msra.mxu0 %v36
    %281 = vmatprep.subr.mxu0 0.0
    %282 = vmatpush1.msra.mxu0 %v37
    %283 = vmatprep.subr.mxu0 0.0
    %284 = vmatpush1.msra.mxu0 %v38
    %285 = vmatprep.subr.mxu0 0.0
    %286 = vmatpush1.msra.mxu0 %v39
    %287 = vmatprep.subr.mxu0 0.0
    %288 = vmatpush1.msra.mxu0 %v40
    %289 = vmatprep.subr.mxu0 0.0
    %290 = vmatpush1.msra.mxu0 %v41
    %291 = vmatprep.subr.mxu0 0.0
    %292 = vmatpush1.msra.mxu0 %v42
    %293 = vmatprep.subr.mxu0 0.0
    %294 = vmatpush1.msra.mxu0 0.0
    %295 = vmatprep.subr.mxu0 0.0
    %296 = vmatpush1.msra.mxu0 0.0
    %297 = vmatprep.subr.mxu0 0.0
    %298 = vmatpush1.msra.mxu0 0.0
    %299 = vmatprep.subr.mxu0 0.0
    %300 = vmatpush1.msra.mxu0 0.0
    %301 = vmatprep.subr.mxu0 0.0
    %302 = vmatpush1.msra.mxu0 0.0
    %303 = vmatprep.subr.mxu0 0.0
    %304 = vmatpush1.msra.mxu0 0.0
    %305 = vmatprep.subr.mxu0 0.0
    %306 = vmatpush1.msra.mxu0 0.0
    %307 = vmatprep.subr.mxu0 0.0
    %308 = vmatpush1.msra.mxu0 0.0
    %309 = vmatprep.subr.mxu0 0.0
    %310 = vmatpush1.msra.mxu0 0.0
    %311 = vmatprep.subr.mxu0 0.0
    %312 = vmatpush1.msra.mxu0 0.0
    %313 = vmatprep.subr.mxu0 0.0
    %314 = vmatpush1.msra.mxu0 0.0
    %315 = vmatprep.subr.mxu0 0.0
    %316 = vmatpush1.msra.mxu0 0.0
    %317 = vmatprep.subr.mxu0 0.0
    %318 = vmatpush1.msra.mxu0 0.0
    %319 = vmatprep.subr.mxu0 0.0
    %320 = vmatpush1.msra.mxu0 0.0
    %321 = vmatprep.subr.mxu0 0.0
    %322 = vmatpush1.msra.mxu0 0.0
    %323 = vmatprep.subr.mxu0 0.0
    %324 = vmatpush1.msra.mxu0 0.0
    %325 = vmatprep.subr.mxu0 0.0
    %326 = vmatpush1.msra.mxu0 0.0
    %327 = vmatprep.subr.mxu0 0.0
    %328 = vmatpush1.msra.mxu0 0.0
    %329 = vmatprep.subr.mxu0 0.0
    %330 = vmatpush1.msra.mxu0 0.0
    %331 = vmatprep.subr.mxu0 0.0
    %332 = vmatpush1.msra.mxu0 0.0
    %333 = vmatprep.subr.mxu0 0.0
    %334 = vmatpush1.msra.mxu0 0.0
    %335 = vmatprep.subr.mxu0 0.0
    %336 = vmatpush1.msra.mxu0 0.0
    %337 = vmatprep.subr.mxu0 0.0
    %338 = vmatpush1.msra.mxu0 0.0
    %339 = vmatprep.subr.mxu0 0.0
    %340 = vmatpush1.msra.mxu0 0.0
    %341 = vmatprep.mubr.f32.mxu0 0.0
    %342 = vmatmul.mubr.f32.gmra.mrb[0].mxu0 %v275
    %v343 = vpop.f32.mrb[0].mxu0
    %v344 = vadd.f32 %v46, %v343
    %v345 = vpop.f32.mrb[0].mxu0
    %346 = vdwg.mxu0
    %348 = vrot.lane.b32.xlu0 %v344, 112
    %v349 = vpop.permute.xlu0 %348
    %v351 = vmax.f32 %v344, %v349
    %vm352 = vcmask 130048
    %v353 = vsel %vm352, %v351, 0.0
    %v354 = vrot.slane %v353, 4
    %v355 = vadd.f32 %v353, %v354
    %v356 = vrot.slane %v355, 2
    %v357 = vadd.f32 %v355, %v356
    %v358 = vrot.slane %v357, 1
    %v359 = vadd.f32 %v357, %v358
    %v360 = vrcp.pop 8.0
    %v361 = vmul.f32 %v359, %v360
    %v362 = vsub.f32 %v351, %v361
    %v363 = vmul.f32 %v362, %v362
    %v364 = vsel %vm352, %v363, 0.0
    %v365 = vrot.slane %v364, 4
    %v366 = vadd.f32 %v364, %v365
    %v367 = vrot.slane %v366, 2
    %v368 = vadd.f32 %v366, %v367
    %v369 = vrot.slane %v368, 1
    %v370 = vadd.f32 %v368, %v369
    %v371 = vmul.f32 %v370, %v360
    %v372 = vadd.f32 %v371, 1e-05
    %v373 = vrsqrt.pop %v372
    %v374 = vmul.f32 %v47, %v373
    %v375 = vmul.f32 %v362, %v374
    %v376 = vadd.f32 %v375, %v48
    %v378 = vsel %vm352, %v376, 0
    %380 = vmatprep.subr.mxu0 0.0
    %381 = vmatpush1.msra.mxu0 %v43
    %382 = vmatprep.subr.mxu0 0.0
    %383 = vmatpush1.msra.mxu0 %v44
    %384 = vmatprep.subr.mxu0 0.0
    %385 = vmatpush1.msra.mxu0 0.0
    %386 = vmatprep.subr.mxu0 0.0
    %387 = vmatpush1.msra.mxu0 0.0
    %388 = vmatprep.subr.mxu0 0.0
    %389 = vmatpush1.msra.mxu0 0.0
    %390 = vmatprep.subr.mxu0 0.0
    %391 = vmatpush1.msra.mxu0 0.0
    %392 = vmatprep.subr.mxu0 0.0
    %393 = vmatpush1.msra.mxu0 0.0
    %394 = vmatprep.subr.mxu0 0.0
    %395 = vmatpush1.msra.mxu0 0.0
    %396 = vmatprep.subr.mxu0 0.0
    %397 = vmatpush1.msra.mxu0 0.0
    %398 = vmatprep.subr.mxu0 0.0
    %399 = vmatpush1.msra.mxu0 0.0
    %400 = vmatprep.subr.mxu0 0.0
    %401 = vmatpush1.msra.mxu0 0.0
    %402 = vmatprep.subr.mxu0 0.0
    %403 = vmatpush1.msra.mxu0 0.0
    %404 = vmatprep.subr.mxu0 0.0
    %405 = vmatpush1.msra.mxu0 0.0
    %406 = vmatprep.subr.mxu0 0.0
    %407 = vmatpush1.msra.mxu0 0.0
    %408 = vmatprep.subr.mxu0 0.0
    %409 = vmatpush1.msra.mxu0 0.0
    %410 = vmatprep.subr.mxu0 0.0
    %411 = vmatpush1.msra.mxu0 0.0
    %412 = vmatprep.subr.mxu0 0.0
    %413 = vmatpush1.msra.mxu0 0.0
    %414 = vmatprep.subr.mxu0 0.0
    %415 = vmatpush1.msra.mxu0 0.0
    %416 = vmatprep.subr.mxu0 0.0
    %417 = vmatpush1.msra.mxu0 0.0
    %418 = vmatprep.subr.mxu0 0.0
    %419 = vmatpush1.msra.mxu0 0.0
    %420 = vmatprep.subr.mxu0 0.0
    %421 = vmatpush1.msra.mxu0 0.0
    %422 = vmatprep.subr.mxu0 0.0
    %423 = vmatpush1.msra.mxu0 0.0
    %424 = vmatprep.subr.mxu0 0.0
    %425 = vmatpush1.msra.mxu0 0.0
    %426 = vmatprep.subr.mxu0 0.0
    %427 = vmatpush1.msra.mxu0 0.0
    %428 = vmatprep.subr.mxu0 0.0
    %429 = vmatpush1.msra.mxu0 0.0
    %430 = vmatprep.subr.mxu0 0.0
    %431 = vmatpush1.msra.mxu0 0.0
    %432 = vmatprep.subr.mxu0 0.0
    %433 = vmatpush1.msra.mxu0 0.0
    %434 = vmatprep.subr.mxu0 0.0
    %435 = vmatpush1.msra.mxu0 0.0
    %436 = vmatprep.subr.mxu0 0.0
    %437 = vmatpush1.msra.mxu0 0.0
    %438 = vmatprep.subr.mxu0 0.0
    %439 = vmatpush1.msra.mxu0 0.0
    %440 = vmatprep.subr.mxu0 0.0
    %441 = vmatpush1.msra.mxu0 0.0
    %442 = vmatprep.subr.mxu0 0.0
    %443 = vmatpush1.msra.mxu0 0.0
    %444 = vmatprep.mubr.f32.mxu0 0.0
    %445 = vmatmul.mubr.f32.gmra.mrb[0].mxu0 %v378
    %v446 = vpop.f32.mrb[0].mxu0
    %v447 = vadd.f32 %v49, %v446
    %v448 = vpop.f32.mrb[0].mxu0
    %449 = vdwg.mxu0
    %450 = vst.msk [vmem:[#allocation5] sm:$0xff] %vm62, %v447
    // Predicated region
    $region18: #{cnn_lstm_forward.1} parent=1 // pred_check
      _
    $region19: #{cnn_lstm_forward.1} parent=1 // pred_check_branch
      %452 = sbr.rel (0) target = $region21
    $region20: #{cnn_lstm_forward.1} parent=1 // pred_region
      %s454 = ssub.s32 128, 128
      %455 = vsyncadd [#allocation4], %s454
      %s457 = sshll.u32 [#allocation5], 4
      %s458 = int_to_ptr.vmem [resolvable:$true] %s457
      %460 = dma.vmem_to_hbm [thread:$0]  %s458, 128, %s3, [#allocation4]
    $region21: #{cnn_lstm_forward.1} parent=1 // pred_fallthru
      _
    // Predicated region
    $region22: #{cnn_lstm_forward.1} parent=1 // pred_check
      _
    $region23: #{cnn_lstm_forward.1} parent=1 // pred_check_branch
      %462 = sbr.rel (0) target = $region25
    $region24: #{cnn_lstm_forward.1} parent=1 // pred_region
      %463 = dma.done [#allocation4], 128
    $region25: #{cnn_lstm_forward.1} parent=1 // pred_fallthru
      _
    %464 = vsyncpa [#allocation3], 1
    %465 = vsyncpa [#allocation4], 1

</llo_original>
